<compile_context>
chip_gen: v7x
topology: tpu7x:2x2x1
jax: 0.10.0
libtpu: 0.0.40
codegen_flags: <defaults>
</compile_context>

<pallas_src>
import functools

import jax
import jax.numpy as jnp
from jax.experimental import pallas as pl
from jax.experimental.pallas import tpu as pltpu

LEAKY_RELU = True
NEG_SLOPE = 0.2
BN_EPS = 1e-5
VMEM_LIMIT = 64 * 1024 * 1024  # sized for realistic N (1k-2k points)


def _act(y):
    if LEAKY_RELU:
        return jnp.where(y >= 0, y, NEG_SLOPE * y)
    return jnp.maximum(y, 0.0)


# ---------------------------------------------------------------------------
# Fused kNN kernel: negative squared distance + iterative top-k selection.
# pd[i, j] = -||x_i - x_j||^2 = 2 x_i.x_j - ||x_i||^2 - ||x_j||^2
# Output: (N, k) int32 neighbor indices (largest pd first, ties -> lowest idx).
# ---------------------------------------------------------------------------
def _knn_kernel(x_ref, idx_ref, *, k):
    x = x_ref[0].astype(jnp.float32)                          # (N, C)
    n = x.shape[0]
    d = jnp.dot(x, x.T, preferred_element_type=jnp.float32)   # (N, N) MXU
    sq = jnp.sum(x * x, axis=1, keepdims=True)                # (N, 1)
    pd = 2.0 * d - sq - sq.T                                  # neg. sq. distance

    iota = jax.lax.broadcasted_iota(jnp.int32, (n, n), 1)     # column index
    col_iota = jax.lax.broadcasted_iota(jnp.int32, (n, k), 1)
    idx_out = jnp.zeros((n, k), dtype=jnp.int32)
    # k is small & static -> unrolled selection (no sort, no HBM NxN roundtrip).
    for j in range(k):
        m = jnp.max(pd, axis=1, keepdims=True)                # (N, 1)
        sel = jnp.where(pd == m, iota, n)                     # sentinel n on miss
        idx_j = jnp.min(sel, axis=1, keepdims=True)           # first argmax (N,1)
        idx_out = jnp.where(col_iota == j, idx_j, idx_out)
        pd = jnp.where(iota == idx_j, -jnp.inf, pd)           # mask the winner
    idx_ref[0] = idx_out


def knn_idx(xp, k):
    B, N, C = xp.shape
    kern = functools.partial(_knn_kernel, k=k)
    return pl.pallas_call(
        kern,
        out_shape=jax.ShapeDtypeStruct((B, N, k), jnp.int32),
        grid=(B,),
        in_specs=[pl.BlockSpec((1, N, C), lambda b: (b, 0, 0))],
        out_specs=pl.BlockSpec((1, N, k), lambda b: (b, 0, 0)),
        compiler_params=pltpu.CompilerParams(
            dimension_semantics=("parallel",),
            vmem_limit_bytes=VMEM_LIMIT),
    )(xp)


# ---------------------------------------------------------------------------
# EdgeConv kernel (restructured):
#   concat(nbr - x, x) @ W == nbr @ W_nbr + x @ (W_self - W_nbr)
# BN scale pre-folded into the weights; gather is done in Cout space.
# ---------------------------------------------------------------------------
def _edgeconv_kernel(x_ref, idx_ref, wn_ref, wd_ref, b_ref, o_ref, *, k):
    x = x_ref[0].astype(jnp.bfloat16)                         # (N, C)
    idx = idx_ref[0]                                          # (N, k) int32
    n = x.shape[0]
    wn = wn_ref[...]                                          # (C, Cout) bf16
    wd = wd_ref[...]                                          # (C, Cout) bf16
    shift = b_ref[...]                                        # (1, Cout) f32

    # Per-grid-step projections (hoisted out of the neighbor loop).
    xp = jnp.dot(x, wn, preferred_element_type=jnp.float32)       # x @ W_nbr
    base = jnp.dot(x, wd, preferred_element_type=jnp.float32) + shift
    xp_bf = xp.astype(jnp.bfloat16)
    cout = xp.shape[1]

    iota = jax.lax.broadcasted_iota(jnp.int32, (n, n), 1)
    acc = jnp.full((n, cout), -jnp.inf, dtype=jnp.float32)
    # k is small & static; gather neighbor j via one-hot matmul in Cout space.
    for j in range(k):
        onehot = (idx[:, j:j + 1] == iota).astype(jnp.bfloat16)   # (N, N) exact
        nbr = jnp.dot(onehot, xp_bf, preferred_element_type=jnp.float32)
        acc = jnp.maximum(acc, _act(nbr + base))
    o_ref[0] = acc


def edgeconv(xp, idx, w_nbr, w_diff, shift, k):
    B, N, C = xp.shape
    Cout = w_nbr.shape[1]
    kern = functools.partial(_edgeconv_kernel, k=k)
    return pl.pallas_call(
        kern,
        out_shape=jax.ShapeDtypeStruct((B, N, Cout), jnp.float32),
        grid=(B,),
        in_specs=[
            pl.BlockSpec((1, N, C), lambda b: (b, 0, 0)),
            pl.BlockSpec((1, N, k), lambda b: (b, 0, 0)),
            pl.BlockSpec((C, Cout), lambda b: (0, 0)),
            pl.BlockSpec((C, Cout), lambda b: (0, 0)),
            pl.BlockSpec((1, Cout), lambda b: (0, 0)),
        ],
        out_specs=pl.BlockSpec((1, N, Cout), lambda b: (b, 0, 0)),
        compiler_params=pltpu.CompilerParams(
            dimension_semantics=("parallel",),
            vmem_limit_bytes=VMEM_LIMIT),
    )(xp, idx, w_nbr, w_diff, shift)


# ---------------------------------------------------------------------------
# conv5 (1x1 Conv1d 512 -> emb) fused with the (x1,x2,x3,x4) concat, BN folded,
# act, and global max/avg pool over points.
# ---------------------------------------------------------------------------
def _conv5_pool_kernel(x1_ref, x2_ref, x3_ref, x4_ref,
                       wa_ref, wb_ref, wc_ref, wd_ref, b_ref,
                       max_ref, mean_ref):
    y = jnp.dot(x1_ref[0].astype(jnp.bfloat16), wa_ref[...],
                preferred_element_type=jnp.float32)
    y = y + jnp.dot(x2_ref[0].astype(jnp.bfloat16), wb_ref[...],
                    preferred_element_type=jnp.float32)
    y = y + jnp.dot(x3_ref[0].astype(jnp.bfloat16), wc_ref[...],
                    preferred_element_type=jnp.float32)
    y = y + jnp.dot(x4_ref[0].astype(jnp.bfloat16), wd_ref[...],
                    preferred_element_type=jnp.float32)
    y = _act(y + b_ref[...])                                  # (N, emb)
    max_ref[0] = jnp.max(y, axis=0, keepdims=True)
    mean_ref[0] = jnp.mean(y, axis=0, keepdims=True)


def conv5_pool(x1, x2, x3, x4, w5a, w5b, w5c, w5d, shift):
    B, N, _ = x1.shape
    emb = w5a.shape[1]
    out_shapes = (
        jax.ShapeDtypeStruct((B, 1, emb), jnp.float32),
        jax.ShapeDtypeStruct((B, 1, emb), jnp.float32),
    )
    return pl.pallas_call(
        _conv5_pool_kernel,
        out_shape=out_shapes,
        grid=(B,),
        in_specs=[
            pl.BlockSpec((1, N, x1.shape[2]), lambda b: (b, 0, 0)),
            pl.BlockSpec((1, N, x2.shape[2]), lambda b: (b, 0, 0)),
            pl.BlockSpec((1, N, x3.shape[2]), lambda b: (b, 0, 0)),
            pl.BlockSpec((1, N, x4.shape[2]), lambda b: (b, 0, 0)),
            pl.BlockSpec((w5a.shape[0], emb), lambda b: (0, 0)),
            pl.BlockSpec((w5b.shape[0], emb), lambda b: (0, 0)),
            pl.BlockSpec((w5c.shape[0], emb), lambda b: (0, 0)),
            pl.BlockSpec((w5d.shape[0], emb), lambda b: (0, 0)),
            pl.BlockSpec((1, emb), lambda b: (0, 0)),
        ],
        out_specs=(
            pl.BlockSpec((1, 1, emb), lambda b: (b, 0, 0)),
            pl.BlockSpec((1, 1, emb), lambda b: (b, 0, 0)),
        ),
        compiler_params=pltpu.CompilerParams(
            dimension_semantics=("parallel",),
            vmem_limit_bytes=VMEM_LIMIT),
    )(x1, x2, x3, x4, w5a, w5b, w5c, w5d, shift)


# ---------------------------------------------------------------------------
# MLP head: linear1+bn6+act -> [dropout=id] -> linear2+bn7+act -> linear3
# (BN scales folded into weights / biases in the wrapper.)
# ---------------------------------------------------------------------------
def _head_kernel(x_ref, w1_ref, b1_ref, w2_ref, b2_ref, w3_ref, b3_ref, o_ref):
    y = jnp.dot(x_ref[...], w1_ref[...], preferred_element_type=jnp.float32)
    y = _act(y + b1_ref[...])
    # dropout -> identity (eval mode)
    y = jnp.dot(y, w2_ref[...], preferred_element_type=jnp.float32)
    y = _act(y + b2_ref[...])
    y = jnp.dot(y, w3_ref[...], preferred_element_type=jnp.float32) + b3_ref[...]
    o_ref[...] = y


def head(x, fp):
    B = x.shape[0]
    out_c = fp["hw3"].shape[1]
    return pl.pallas_call(
        _head_kernel,
        out_shape=jax.ShapeDtypeStruct((B, out_c), jnp.float32),
    )(x, fp["hw1"], fp["hb1"], fp["hw2"], fp["hb2"], fp["hw3"], fp["hb3"])


# ---------------------------------------------------------------------------
# Parameter folding: BN scale folded into weights; EdgeConv weights split into
# W_nbr / (W_self - W_nbr); conv5 weights split per concat block. bf16 for MXU.
# ---------------------------------------------------------------------------
def fold_params(p):
    def split_fold(w, scale):
        ws = w * scale                                       # (2C, Cout) f32
        c = w.shape[0] // 2
        w_nbr = ws[:c]
        w_diff = ws[c:] - ws[:c]
        return w_nbr.astype(jnp.bfloat16), w_diff.astype(jnp.bfloat16)

    f = {}
    f["wn1"], f["wd1"] = split_fold(p["w1"], p["s1"]); f["b1"] = p["b1"]
    f["wn2"], f["wd2"] = split_fold(p["w2"], p["s2"]); f["b2"] = p["b2"]
    f["wn3"], f["wd3"] = split_fold(p["w3"], p["s3"]); f["b3"] = p["b3"]
    f["wn4"], f["wd4"] = split_fold(p["w4"], p["s4"]); f["b4"] = p["b4"]

    w5s = p["w5"] * p["s5"]                                  # (512, emb)
    f["w5a"] = w5s[0:64].astype(jnp.bfloat16)
    f["w5b"] = w5s[64:128].astype(jnp.bfloat16)
    f["w5c"] = w5s[128:256].astype(jnp.bfloat16)
    f["w5d"] = w5s[256:512].astype(jnp.bfloat16)
    f["b5"] = p["b5"]

    f["hw1"] = p["w_lin1"] * p["s6"]; f["hb1"] = p["b6"]
    f["hw2"] = p["w_lin2"] * p["s7"]
    f["hb2"] = p["bias_lin2"] * p["s7"] + p["b7"]
    f["hw3"] = p["w_lin3"]; f["hb3"] = p["bias_lin3"]
    return f


# ---------------------------------------------------------------------------
# Full forward
# ---------------------------------------------------------------------------
def dgcnn_forward(x, normal, params, k):
    del normal  # only used by the (skipped) upsample branches
    fp = fold_params(params)
    xp = x.astype(jnp.float32)                               # (B, N, 3)

    idx = knn_idx(xp, k)
    x1 = edgeconv(xp, idx, fp["wn1"], fp["wd1"], fp["b1"], k)   # (B,N,64)
    idx = knn_idx(x1, k)
    x2 = edgeconv(x1, idx, fp["wn2"], fp["wd2"], fp["b2"], k)   # (B,N,64)
    idx = knn_idx(x2, k)
    x3 = edgeconv(x2, idx, fp["wn3"], fp["wd3"], fp["b3"], k)   # (B,N,128)
    idx = knn_idx(x3, k)
    x4 = edgeconv(x3, idx, fp["wn4"], fp["wd4"], fp["b4"], k)   # (B,N,256)

    pooled_max, pooled_mean = conv5_pool(
        x1, x2, x3, x4, fp["w5a"], fp["w5b"], fp["w5c"], fp["w5d"], fp["b5"])
    pooled = jnp.concatenate([pooled_max[:, 0, :], pooled_mean[:, 0, :]],
                             axis=-1)                        # (B, 2*emb)
    return head(pooled, fp)                                  # (B, out)


# ---------------------------------------------------------------------------
# Deterministic parameter init (PyTorch-layout-equivalent, eval-mode BN).
# ---------------------------------------------------------------------------
def make_params(key, emb_dims, output_channels):
    ks = iter(jax.random.split(key, 32))

    def w(shape, scale=0.1):
        return scale * jax.random.normal(next(ks), shape, dtype=jnp.float32)

    def bn(c):
        gamma = 1.0 + 0.05 * jax.random.normal(next(ks), (1, c), dtype=jnp.float32)
        beta = 0.05 * jax.random.normal(next(ks), (1, c), dtype=jnp.float32)
        scale = gamma / jnp.sqrt(1.0 + BN_EPS)   # eval-mode BN: mean=0, var=1
        return scale, beta

    p = {}
    p["w1"] = w((6, 64));         p["s1"], p["b1"] = bn(64)
    p["w2"] = w((128, 64));       p["s2"], p["b2"] = bn(64)
    p["w3"] = w((128, 128));      p["s3"], p["b3"] = bn(128)
    p["w4"] = w((256, 256));      p["s4"], p["b4"] = bn(256)
    p["w5"] = w((512, emb_dims)); p["s5"], p["b5"] = bn(emb_dims)
    p["w_lin1"] = w((2 * emb_dims, 512)); p["s6"], p["b6"] = bn(512)
    p["w_lin2"] = w((512, 256)); p["bias_lin2"] = w((1, 256))
    p["s7"], p["b7"] = bn(256)
    p["w_lin3"] = w((256, output_channels)); p["bias_lin3"] = w((1, output_channels))
    return p


if __name__ == "__main__":
    B, N, K = 2, 16, 4
    EMB_DIMS, OUT_CH = 32, 40

    key = jax.random.PRNGKey(0)
    k_x, k_n, k_p = jax.random.split(key, 3)
    x = jax.random.normal(k_x, (B, N, 3), dtype=jnp.float32)       # (B, N, 3) points
    normal = jax.random.normal(k_n, (B, N, 3), dtype=jnp.float32)  # unused in this path
    params = make_params(k_p, EMB_DIMS, OUT_CH)

    out = dgcnn_forward(x, normal, params, K)
    out = jax.block_until_ready(out)
    assert out.shape == (B, OUT_CH), out.shape
    assert jnp.all(jnp.isfinite(out))
    print("KERNEL_OK")
</pallas_src>

<mosaic_0001>
module attributes {stable_mosaic.version = 11 : i64} {
  func.func @_knn_kernel(%arg0: i32, %arg1: memref<1x16x3xf32, #tpu.memory_space<vmem>>, %arg2: memref<1x16x4xi32, #tpu.memory_space<vmem>>) attributes {dimension_semantics = [#tpu.dimension_semantics<parallel>], iteration_bounds = array<i64: 2>, scalar_prefetch = 0 : i64, scratch_operands = 0 : i64, tpu.core_type = #tpu.core_type<tc>, window_params = [{transform_indices = @transform_0, window_bounds = array<i64: 1, 16, 3>}, {transform_indices = @transform_1, window_bounds = array<i64: 1, 16, 4>}]} {
    %c0 = arith.constant 0 : index
    %c0_0 = arith.constant 0 : index
    %c0_1 = arith.constant 0 : index
    %0 = vector.load %arg1[%c0, %c0_0, %c0_1] : memref<1x16x3xf32, #tpu.memory_space<vmem>>, vector<1x16x3xf32>
    %1 = vector.shape_cast %0 : vector<1x16x3xf32> to vector<16x3xf32>
    %2 = tpu.transpose %1, [1, 0] : vector<16x3xf32> -> vector<3x16xf32>
    %cst = arith.constant dense<0.000000e+00> : vector<16x16xf32>
    %3 = tpu.matmul %1, %2, %cst {dimension_numbers = #tpu.dot_dimension_numbers<[1], [0], [0], [1], [0, 0, 1, 1], [], []>} : vector<16x3xf32>, vector<3x16xf32>, vector<16x16xf32> -> vector<16x16xf32>
    %4 = arith.mulf %1, %1 : vector<16x3xf32>
    %cst_2 = arith.constant dense<0.000000e+00> : vector<16xf32>
    %5 = vector.multi_reduction <add>, %4, %cst_2 [1] : vector<16x3xf32> to vector<16xf32>
    %6 = vector.shape_cast %5 : vector<16xf32> to vector<16x1xf32>
    %cst_3 = arith.constant 2.000000e+00 : f32
    %7 = vector.broadcast %cst_3 : f32 to vector<16x16xf32>
    %8 = arith.mulf %7, %3 : vector<16x16xf32>
    %9 = vector.broadcast %6 : vector<16x1xf32> to vector<16x16xf32>
    %10 = arith.subf %8, %9 : vector<16x16xf32>
    %11 = tpu.transpose %6, [1, 0] : vector<16x1xf32> -> vector<1x16xf32>
    %12 = vector.broadcast %11 : vector<1x16xf32> to vector<16x16xf32>
    %13 = arith.subf %10, %12 : vector<16x16xf32>
    %14 = tpu.iota {dimensions = array<i32: 1>} : vector<16x16xi32>
    %15 = tpu.iota {dimensions = array<i32: 1>} : vector<16x4xi32>
    %c0_i32 = arith.constant 0 : i32
    %16 = vector.broadcast %c0_i32 : i32 to vector<16x4xi32>
    %cst_4 = arith.constant dense<0xFF800000> : vector<16xf32>
    %17 = vector.multi_reduction <maximumf>, %13, %cst_4 [1] : vector<16x16xf32> to vector<16xf32>
    %18 = vector.shape_cast %17 : vector<16xf32> to vector<16x1xf32>
    %19 = vector.broadcast %18 : vector<16x1xf32> to vector<16x16xf32>
    %20 = arith.cmpf oeq, %13, %19 : vector<16x16xf32>
    %c16_i32 = arith.constant 16 : i32
    %21 = vector.broadcast %c16_i32 : i32 to vector<16x16xi32>
    %22 = arith.select %20, %14, %21 : vector<16x16xi1>, vector<16x16xi32>
    %cst_5 = arith.constant dense<2147483647> : vector<16xi32>
    %23 = vector.multi_reduction <minsi>, %22, %cst_5 [1] : vector<16x16xi32> to vector<16xi32>
    %24 = vector.shape_cast %23 : vector<16xi32> to vector<16x1xi32>
    %c0_i32_6 = arith.constant 0 : i32
    %25 = vector.broadcast %c0_i32_6 : i32 to vector<16x4xi32>
    %26 = arith.cmpi eq, %15, %25 : vector<16x4xi32>
    %27 = vector.shape_cast %24 : vector<16x1xi32> to vector<16x1xi32>
    %28 = vector.broadcast %27 : vector<16x1xi32> to vector<16x4xi32>
    %29 = arith.select %26, %28, %16 : vector<16x4xi1>, vector<16x4xi32>
    %30 = vector.broadcast %24 : vector<16x1xi32> to vector<16x16xi32>
    %31 = arith.cmpi eq, %14, %30 : vector<16x16xi32>
    %cst_7 = arith.constant 0xFF800000 : f32
    %32 = vector.broadcast %cst_7 : f32 to vector<16x16xf32>
    %33 = arith.select %31, %32, %13 : vector<16x16xi1>, vector<16x16xf32>
    %cst_8 = arith.constant dense<0xFF800000> : vector<16xf32>
    %34 = vector.multi_reduction <maximumf>, %33, %cst_8 [1] : vector<16x16xf32> to vector<16xf32>
    %35 = vector.shape_cast %34 : vector<16xf32> to vector<16x1xf32>
    %36 = vector.broadcast %35 : vector<16x1xf32> to vector<16x16xf32>
    %37 = arith.cmpf oeq, %33, %36 : vector<16x16xf32>
    %c16_i32_9 = arith.constant 16 : i32
    %38 = vector.broadcast %c16_i32_9 : i32 to vector<16x16xi32>
    %39 = arith.select %37, %14, %38 : vector<16x16xi1>, vector<16x16xi32>
    %cst_10 = arith.constant dense<2147483647> : vector<16xi32>
    %40 = vector.multi_reduction <minsi>, %39, %cst_10 [1] : vector<16x16xi32> to vector<16xi32>
    %41 = vector.shape_cast %40 : vector<16xi32> to vector<16x1xi32>
    %c1_i32 = arith.constant 1 : i32
    %42 = vector.broadcast %c1_i32 : i32 to vector<16x4xi32>
    %43 = arith.cmpi eq, %15, %42 : vector<16x4xi32>
    %44 = vector.shape_cast %41 : vector<16x1xi32> to vector<16x1xi32>
    %45 = vector.broadcast %44 : vector<16x1xi32> to vector<16x4xi32>
    %46 = arith.select %43, %45, %29 : vector<16x4xi1>, vector<16x4xi32>
    %47 = vector.broadcast %41 : vector<16x1xi32> to vector<16x16xi32>
    %48 = arith.cmpi eq, %14, %47 : vector<16x16xi32>
    %cst_11 = arith.constant 0xFF800000 : f32
    %49 = vector.broadcast %cst_11 : f32 to vector<16x16xf32>
    %50 = arith.select %48, %49, %33 : vector<16x16xi1>, vector<16x16xf32>
    %cst_12 = arith.constant dense<0xFF800000> : vector<16xf32>
    %51 = vector.multi_reduction <maximumf>, %50, %cst_12 [1] : vector<16x16xf32> to vector<16xf32>
    %52 = vector.shape_cast %51 : vector<16xf32> to vector<16x1xf32>
    %53 = vector.broadcast %52 : vector<16x1xf32> to vector<16x16xf32>
    %54 = arith.cmpf oeq, %50, %53 : vector<16x16xf32>
    %c16_i32_13 = arith.constant 16 : i32
    %55 = vector.broadcast %c16_i32_13 : i32 to vector<16x16xi32>
    %56 = arith.select %54, %14, %55 : vector<16x16xi1>, vector<16x16xi32>
    %cst_14 = arith.constant dense<2147483647> : vector<16xi32>
    %57 = vector.multi_reduction <minsi>, %56, %cst_14 [1] : vector<16x16xi32> to vector<16xi32>
    %58 = vector.shape_cast %57 : vector<16xi32> to vector<16x1xi32>
    %c2_i32 = arith.constant 2 : i32
    %59 = vector.broadcast %c2_i32 : i32 to vector<16x4xi32>
    %60 = arith.cmpi eq, %15, %59 : vector<16x4xi32>
    %61 = vector.shape_cast %58 : vector<16x1xi32> to vector<16x1xi32>
    %62 = vector.broadcast %61 : vector<16x1xi32> to vector<16x4xi32>
    %63 = arith.select %60, %62, %46 : vector<16x4xi1>, vector<16x4xi32>
    %64 = vector.broadcast %58 : vector<16x1xi32> to vector<16x16xi32>
    %65 = arith.cmpi eq, %14, %64 : vector<16x16xi32>
    %cst_15 = arith.constant 0xFF800000 : f32
    %66 = vector.broadcast %cst_15 : f32 to vector<16x16xf32>
    %67 = arith.select %65, %66, %50 : vector<16x16xi1>, vector<16x16xf32>
    %cst_16 = arith.constant dense<0xFF800000> : vector<16xf32>
    %68 = vector.multi_reduction <maximumf>, %67, %cst_16 [1] : vector<16x16xf32> to vector<16xf32>
    %69 = vector.shape_cast %68 : vector<16xf32> to vector<16x1xf32>
    %70 = vector.broadcast %69 : vector<16x1xf32> to vector<16x16xf32>
    %71 = arith.cmpf oeq, %67, %70 : vector<16x16xf32>
    %c16_i32_17 = arith.constant 16 : i32
    %72 = vector.broadcast %c16_i32_17 : i32 to vector<16x16xi32>
    %73 = arith.select %71, %14, %72 : vector<16x16xi1>, vector<16x16xi32>
    %cst_18 = arith.constant dense<2147483647> : vector<16xi32>
    %74 = vector.multi_reduction <minsi>, %73, %cst_18 [1] : vector<16x16xi32> to vector<16xi32>
    %75 = vector.shape_cast %74 : vector<16xi32> to vector<16x1xi32>
    %c3_i32 = arith.constant 3 : i32
    %76 = vector.broadcast %c3_i32 : i32 to vector<16x4xi32>
    %77 = arith.cmpi eq, %15, %76 : vector<16x4xi32>
    %78 = vector.shape_cast %75 : vector<16x1xi32> to vector<16x1xi32>
    %79 = vector.broadcast %78 : vector<16x1xi32> to vector<16x4xi32>
    %80 = arith.select %77, %79, %63 : vector<16x4xi1>, vector<16x4xi32>
    %c0_19 = arith.constant 0 : index
    %c0_20 = arith.constant 0 : index
    %c0_21 = arith.constant 0 : index
    %81 = vector.load %arg2[%c0_19, %c0_20, %c0_21] : memref<1x16x4xi32, #tpu.memory_space<vmem>>, vector<1x16x4xi32>
    %82 = vector.shape_cast %81 : vector<1x16x4xi32> to vector<16x4xi32>
    %83 = vector.shape_cast %80 : vector<16x4xi32> to vector<1x16x4xi32>
    tpu.vector_store %arg2[%c0_19, %c0_20, %c0_21], %83 {strides = array<i32>} : memref<1x16x4xi32, #tpu.memory_space<vmem>>, vector<1x16x4xi32>,
    return
  }
  func.func @transform_0(%arg0: i32) -> (i32, i32, i32) {
    %c0_i32 = arith.constant 0 : i32
    %c0_i32_0 = arith.constant 0 : i32
    %c0_i32_1 = arith.constant 0 : i32
    return %arg0, %c0_i32, %c0_i32_0 : i32, i32, i32
  }
  func.func @transform_1(%arg0: i32) -> (i32, i32, i32) {
    %c0_i32 = arith.constant 0 : i32
    %c0_i32_0 = arith.constant 0 : i32
    %c0_i32_1 = arith.constant 0 : i32
    return %arg0, %c0_i32, %c0_i32_0 : i32, i32, i32
  }
}

</mosaic_0001>

<llo_original>
// kernel: tpu_custom_call.1
$region0: #{tpu_custom_call.1}
  #allocation0 [shape = 'u32[]', space=smem, size = 0x4, offset = 0x4, fixed_abs, tag = 'smem constant byte address 0x4 - core index']
  #allocation1 [shape = 'u32[144,128]{1,0:T(1,128)}', space=vmem, size = 0x12000, scoped, tag = 'internal scratch']
  %s0 = inlined_call_operand.hbm [shape: f32[2,16,3], index: 0, kind: input, shape index: {}]
  %s1 = inlined_call_operand.hbm [shape: s32[2,16,4], index: 1, kind: output, shape index: {}]
  %s2 = sld [smem:[#allocation0]]
  $region41: #{tpu_custom_call.1} parent=0
    _
  %s4 = ssub.s32 1, %s2
  %s5 = scalar_select 0, %s4, %s2
  $region1: #{tpu_custom_call.1} parent=0
    #allocation2 [shape = 'u8[16384]{0}', space=vmem, size = 0x4000, scoped, tag = 'input window, operand 0']
    #allocation3 [shape = 's32[2]{0}', space=sflag, size = 0x8, scoped, tag = 'scoped memory for tpu_custom_call.1']
    #allocation4 [shape = 's32[2]{0}', space=sflag, size = 0x8, scoped, tag = 'scoped memory for tpu_custom_call.1']
    #allocation5 [shape = 'u8[16384]{0}', space=vmem, size = 0x4000, scoped, tag = 'output window, operand 0']
    %6 = vsyncpa [#allocation3], 0
    %s7 = scalar_lea.sflag [#allocation3], 1
    %8 = vsyncpa %s7, 0
    %9 = vsyncpa [#allocation4], 0
    %s10 = scalar_lea.sflag [#allocation4], 1
    %11 = vsyncpa %s10, 0
    loop: start=0, step=1, limit=4
    $region2: #{tpu_custom_call.1} parent=1 // loop_pre_header
      _
    $region3: #{tpu_custom_call.1} parent=1 // loop_header
      %s13 = sphi 0, %s17
      %p14 = scmp.ge.s32.totalorder %s13, 4
      %s23 = sphi 0, %s25
      %s26 = sphi 0, %s23
      %s27 = sphi 0, %s26
      %s43 = sphi 0, %s27
      %s49 = sphi 0, %s51
      %s52 = sphi 0, %s49
      %s53 = sphi 0, %s52
      %s69 = sphi 0, %s53
    $region4: #{tpu_custom_call.1} parent=1 // loop_header_branch
      %16 = sbr.rel (%p14) target = $region8
    $region5: #{tpu_custom_call.1} parent=1 // loop_body
      %s18 = ssub.s32 %s13, 1
      %s19 = ssub.s32 %s13, 2
      %s20 = sadd.s32 %s13, 1
      %s21 = ssub.s32 %s13, %s20
      %p22 = scmp.eq.s32.totalorder %s21, 0
      %s24 = sadd.s32 %s23, 1
      %s25 = scalar_select %p22, %s23, %s24
      %p28 = pneg %p22
      %p29 = scmp.eq.s32.totalorder %s13, 1
      %p30 = por %p28, %p29
      %p31 = scmp.ne.s32.totalorder %s23, %s26
      %p32 = scmp.eq.s32.totalorder %s13, 0
      %p33 = por %p31, %p32
      %p34 = scmp.ne.s32.totalorder %s23, %s26
      %p35 = scmp.eq.s32.totalorder %s18, 1
      %p36 = por %p34, %p35
      %p37 = scmp.ne.s32.totalorder %s26, %s27
      %p38 = scmp.eq.s32.totalorder %s18, 0
      %p39 = por %p37, %p38
      %p40 = scmp.ne.s32.totalorder %s26, %s27
      %p41 = scmp.eq.s32.totalorder %s19, 1
      %p42 = por %p40, %p41
      %p44 = scmp.ne.s32.totalorder %s27, %s43
      %p45 = scmp.eq.s32.totalorder %s19, 0
      %p46 = por %p44, %p45
      %s47 = ssub.s32 %s13, %s20
      %p48 = scmp.eq.s32.totalorder %s47, 0
      %s50 = sadd.s32 %s49, 1
      %s51 = scalar_select %p48, %s49, %s50
      %p54 = pneg %p48
      %p55 = scmp.eq.s32.totalorder %s13, 1
      %p56 = por %p54, %p55
      %p57 = scmp.ne.s32.totalorder %s49, %s52
      %p58 = scmp.eq.s32.totalorder %s13, 0
      %p59 = por %p57, %p58
      %p60 = scmp.ne.s32.totalorder %s49, %s52
      %p61 = scmp.eq.s32.totalorder %s18, 1
      %p62 = por %p60, %p61
      %p63 = scmp.ne.s32.totalorder %s52, %s53
      %p64 = scmp.eq.s32.totalorder %s18, 0
      %p65 = por %p63, %p64
      %p66 = scmp.ne.s32.totalorder %s52, %s53
      %p67 = scmp.eq.s32.totalorder %s19, 1
      %p68 = por %p66, %p67
      %p70 = scmp.ne.s32.totalorder %s53, %s69
      %p71 = scmp.eq.s32.totalorder %s19, 0
      %p72 = por %p70, %p71
      %p73 = scmp.le.s32.totalorder 1, %s13
      %p74 = scmp.lt.s32.totalorder %s13, 3
      %p75 = pnand %p73, %p74
      %p76 = pneg %p75
      // Predicated region
      $region9: #{tpu_custom_call.1} parent=5 // pred_check
        _
      $region10: #{tpu_custom_call.1} parent=5 // pred_check_branch
        %78 = sbr.rel (%p75) target = $region12
      $region11: #{tpu_custom_call.1} parent=5 // pred_region
        %s79 = ssub.s32 %s13, 1
      $region12: #{tpu_custom_call.1} parent=5 // pred_fallthru
        _
      %p80 = scmp.lt.s32.totalorder %s13, 2
      // Predicated region
      $region13: #{tpu_custom_call.1} parent=5 // pred_check
        %p81 = pneg %p80
      $region14: #{tpu_custom_call.1} parent=5 // pred_check_branch
        %83 = sbr.rel (%p81) target = $region16
      $region15: #{tpu_custom_call.1} parent=5 // pred_region
        // Predicated region
        $region17: #{tpu_custom_call.1} parent=15 // pred_check
          %p84 = pneg %p33
        $region18: #{tpu_custom_call.1} parent=15 // pred_check_branch
          %86 = sbr.rel (%p84) target = $region20
        $region19: #{tpu_custom_call.1} parent=15 // pred_region
          %s87 = sand.u32 %s23, 1
          %s88 = scalar_lea.sflag [#allocation3], %s87
          %s89 = sand.u32 %s23, 1
          %s90 = smul.addr %s89, 16
          %s91 = scalar_lea.vmem [#allocation2], %s90
          %s93 = ssub.s32 256, 256
          %94 = vsyncadd %s88, %s93
          %s95 = smul.addr %s13, 2
          %s96 = smul.addr %s95, 128
          %s97 = scalar_lea.hbm %s0, %s96
          %s98 = sshll.u32 %s91, 4
          %s99 = int_to_ptr.vmem [resolvable:$true] %s98
          %104 = dma.hbm_to_vmem [thread:$0]  %s97, 256, %s99, %s88, 128, 128, 8
        $region20: #{tpu_custom_call.1} parent=15 // pred_fallthru
          _
      $region16: #{tpu_custom_call.1} parent=5 // pred_fallthru
        _
      %p105 = scmp.le.s32.totalorder 1, %s13
      %p106 = scmp.lt.s32.totalorder %s13, 3
      %p107 = pnand %p105, %p106
      %p108 = pneg %p107
      // Predicated region
      $region21: #{tpu_custom_call.1} parent=5 // pred_check
        _
      $region22: #{tpu_custom_call.1} parent=5 // pred_check_branch
        %110 = sbr.rel (%p107) target = $region24
      $region23: #{tpu_custom_call.1} parent=5 // pred_region
        %s111 = ssub.s32 %s13, 1
        %s112 = sand.u32 %s26, 1
        %s113 = scalar_lea.sflag [#allocation3], %s112
        %s114 = sand.u32 %s26, 1
        %s115 = smul.addr %s114, 16
        %s116 = scalar_lea.vmem [#allocation2], %s115
        // Predicated region
        $region25: #{tpu_custom_call.1} parent=23 // pred_check
          %p117 = pneg %p39
        $region26: #{tpu_custom_call.1} parent=23 // pred_check_branch
          %119 = sbr.rel (%p117) target = $region28
        $region27: #{tpu_custom_call.1} parent=23 // pred_region
          %120 = dma.done %s113, 256
        $region28: #{tpu_custom_call.1} parent=23 // pred_fallthru
          _
        %s121 = sand.u32 %s26, 1
        %s122 = scalar_lea.sflag [#allocation3], %s121
        %s123 = sand.u32 %s26, 1
        %s124 = smul.addr %s123, 16
        %s125 = scalar_lea.vmem [#allocation2], %s124
        %p126 = pneg %p39
        %p127 = pneg %p36
        %p128 = pneg %p65
        %p129 = pneg %p62
        %s130 = sand.u32 %s52, 1
        %s131 = scalar_lea.sflag [#allocation4], %s130
        %s132 = sand.u32 %s52, 1
        %s133 = smul.addr %s132, 16
        %s134 = scalar_lea.vmem [#allocation5], %s133
        %v135 = vld [vmem:[%s116] sm:$0xff]
        %v136 = vld [vmem:[%s116 + $0x8] sm:$0xff]
        %vm137 = vcmask 23552
        %v139 = vsel %vm137, %v135, 0
        %v142 = vsel %vm137, %v136, 0
        %144 = vmatprep.subr.mxu0 0.0
        %145 = vmatpush1.xpose.msra.mxu0 %v139
        %146 = vmatprep.subr.mxu0 0.0
        %147 = vmatpush1.xpose.msra.mxu0 %v142
        %148 = vmatprep.subr.mxu0 0.0
        %149 = vmatpush1.xpose.msra.mxu0 0.0
        %150 = vmatprep.subr.mxu0 0.0
        %151 = vmatpush1.xpose.msra.mxu0 0.0
        %152 = vmatprep.subr.mxu0 0.0
        %153 = vmatpush1.xpose.msra.mxu0 0.0
        %154 = vmatprep.subr.mxu0 0.0
        %155 = vmatpush1.xpose.msra.mxu0 0.0
        %156 = vmatprep.subr.mxu0 0.0
        %157 = vmatpush1.xpose.msra.mxu0 0.0
        %158 = vmatprep.subr.mxu0 0.0
        %159 = vmatpush1.xpose.msra.mxu0 0.0
        %160 = vmatprep.subr.mxu0 0.0
        %161 = vmatpush1.xpose.msra.mxu0 0.0
        %162 = vmatprep.subr.mxu0 0.0
        %163 = vmatpush1.xpose.msra.mxu0 0.0
        %164 = vmatprep.subr.mxu0 0.0
        %165 = vmatpush1.xpose.msra.mxu0 0.0
        %166 = vmatprep.subr.mxu0 0.0
        %167 = vmatpush1.xpose.msra.mxu0 0.0
        %168 = vmatprep.subr.mxu0 0.0
        %169 = vmatpush1.xpose.msra.mxu0 0.0
        %170 = vmatprep.subr.mxu0 0.0
        %171 = vmatpush1.xpose.msra.mxu0 0.0
        %172 = vmatprep.subr.mxu0 0.0
        %173 = vmatpush1.xpose.msra.mxu0 0.0
        %174 = vmatprep.subr.mxu0 0.0
        %175 = vmatpush1.xpose.msra.mxu0 0.0
        %176 = vmatprep.subr.mxu0 0.0
        %177 = vmatpush1.xpose.msra.mxu0 0.0
        %178 = vmatprep.subr.mxu0 0.0
        %179 = vmatpush1.xpose.msra.mxu0 0.0
        %180 = vmatprep.subr.mxu0 0.0
        %181 = vmatpush1.xpose.msra.mxu0 0.0
        %182 = vmatprep.subr.mxu0 0.0
        %183 = vmatpush1.xpose.msra.mxu0 0.0
        %184 = vmatprep.subr.mxu0 0.0
        %185 = vmatpush1.xpose.msra.mxu0 0.0
        %186 = vmatprep.subr.mxu0 0.0
        %187 = vmatpush1.xpose.msra.mxu0 0.0
        %188 = vmatprep.subr.mxu0 0.0
        %189 = vmatpush1.xpose.msra.mxu0 0.0
        %190 = vmatprep.subr.mxu0 0.0
        %191 = vmatpush1.xpose.msra.mxu0 0.0
        %192 = vmatprep.subr.mxu0 0.0
        %193 = vmatpush1.xpose.msra.mxu0 0.0
        %194 = vmatprep.subr.mxu0 0.0
        %195 = vmatpush1.xpose.msra.mxu0 0.0
        %196 = vmatprep.subr.mxu0 0.0
        %197 = vmatpush1.xpose.msra.mxu0 0.0
        %198 = vmatprep.subr.mxu0 0.0
        %199 = vmatpush1.xpose.msra.mxu0 0.0
        %200 = vmatprep.subr.mxu0 0.0
        %201 = vmatpush1.xpose.msra.mxu0 0.0
        %202 = vmatprep.subr.mxu0 0.0
        %203 = vmatpush1.xpose.msra.mxu0 0.0
        %204 = vmatprep.subr.mxu0 0.0
        %205 = vmatpush1.xpose.msra.mxu0 0.0
        %206 = vmatprep.subr.mxu0 0.0
        %207 = vmatpush1.xpose.msra.mxu0 0.0
        %208 = vmatprep.mubr.f32.mxu0 0.0
        %209 = vmatmul.mubr.f32.gmra.mrb[0].mxu0 %v139
        %v210 = vpop.f32.mrb[0].mxu0
        %v211 = vadd.f32 0.0, %v210
        %v212 = vpop.f32.mrb[0].mxu0
        %213 = vmatprep.mubr.f32.mxu0 0.0
        %214 = vmatmul.mubr.f32.gmra.mrb[0].mxu0 %v142
        %v215 = vpop.f32.mrb[0].mxu0
        %v216 = vadd.f32 0.0, %v215
        %v217 = vpop.f32.mrb[0].mxu0
        %218 = vdwg.mxu0
        %v219 = vmul.f32 %v135, %v135
        %v220 = vmul.f32 %v136, %v136
        %v221 = vsel %vm137, %v219, 0.0
        %222 = vadd.xlane.f32.xlu0 %v221
        %v223 = vpop.xlane.xlu0 %222
        %v224 = vsel %vm137, %v220, 0.0
        %225 = vadd.xlane.f32.xlu0 %v224
        %v226 = vpop.xlane.xlu0 %225
        %v227 = vmul.f32 %v211, 2.0
        %v228 = vmul.f32 %v216, 2.0
        %v229 = vsub.f32 %v227, %v223
        %v230 = vsub.f32 %v228, %v226
        %231 = vxpose.xlu0.b32.start [1/16] %v223, 128
        %232 = vxpose.xlu0.b32.cont [2/16] %v226, 128
        %233 = vxpose.xlu0.b32.cont [3/16] 0.0, 128
        %234 = vxpose.xlu0.b32.cont [4/16] 0.0, 128
        %235 = vxpose.xlu0.b32.cont [5/16] 0.0, 128
        %236 = vxpose.xlu0.b32.cont [6/16] 0.0, 128
        %237 = vxpose.xlu0.b32.cont [7/16] 0.0, 128
        %238 = vxpose.xlu0.b32.cont [8/16] 0.0, 128
        %239 = vxpose.xlu0.b32.cont [9/16] 0.0, 128
        %240 = vxpose.xlu0.b32.cont [10/16] 0.0, 128
        %241 = vxpose.xlu0.b32.cont [11/16] 0.0, 128
        %242 = vxpose.xlu0.b32.cont [12/16] 0.0, 128
        %243 = vxpose.xlu0.b32.cont [13/16] 0.0, 128
        %244 = vxpose.xlu0.b32.cont [14/16] 0.0, 128
        %245 = vxpose.xlu0.b32.cont [15/16] 0.0, 128
        %246 = vxpose.xlu0.b32.end [16/16] 0.0, 128
        %v247 = vpop.trf.xlu0
        %v248 = vpop.trf.xlu0
        %v249 = vpop.trf.xlu0
        %v250 = vpop.trf.xlu0
        %v251 = vpop.trf.xlu0
        %v252 = vpop.trf.xlu0
        %v253 = vpop.trf.xlu0
        %v254 = vpop.trf.xlu0
        %v255 = vpop.trf.xlu0
        %v256 = vpop.trf.xlu0
        %v257 = vpop.trf.xlu0
        %v258 = vpop.trf.xlu0
        %v259 = vpop.trf.xlu0
        %v260 = vpop.trf.xlu0
        %v261 = vpop.trf.xlu0
        %v262 = vpop.trf.xlu0
        %v263 = vlaneseq
        %v264 = vshrl.u32 %v263, 7
        %v265 = vsub.s32 0, %v264
        %v266 = vrot.slane %v247, %v265
        %v267 = vsub.f32 %v229, %v266
        %v268 = vsub.f32 %v230, %v266
        %v269 = vlaneseq
        %v270 = vand.u32 %v269, 127
        %vm271 = vcmask 130048
        %v272 = vsel %vm271, %v267, -inf
        %273 = vmax.xlane.f32.xlu0 %v272
        %v274 = vpop.xlane.xlu0 %273
        %v275 = vsel %vm271, %v268, -inf
        %276 = vmax.xlane.f32.xlu0 %v275
        %v277 = vpop.xlane.xlu0 %276
        %vm278 = vcmp.eq.f32.partialorder %v267, %v274
        %vm279 = vcmp.eq.f32.partialorder %v268, %v277
        %v280 = vsel %vm278, %v270, 16
        %v281 = vsel %vm279, %v270, 16
        %v282 = vsel %vm271, %v280, 2147483647
        %v283 = vand.u32 %v282, 65535
        %v284 = vshra.s32 %v282, 16
        %v285 = vcvt.s32.f32 %v283
        %v286 = vcvt.s32.f32 %v284
        %287 = vmin.xlane.f32.xlu0 %v286
        %v288 = vpop.xlane.xlu0 %287
        %vm289 = vcmp.eq.f32.partialorder %v286, %v288
        %v290 = vsel %vm289, %v285, inf
        %291 = vmin.xlane.f32.xlu0 %v290
        %v292 = vpop.xlane.xlu0 %291
        %v293 = vcvt.f32.s32 %v292
        %v294 = vcvt.f32.s32 %v288
        %v295 = vshll.u32 %v294, 16
        %v296 = vadd.s32 %v295, %v293
        %v297 = vsel %vm271, %v281, 2147483647
        %v298 = vand.u32 %v297, 65535
        %v299 = vshra.s32 %v297, 16
        %v300 = vcvt.s32.f32 %v298
        %v301 = vcvt.s32.f32 %v299
        %302 = vmin.xlane.f32.xlu0 %v301
        %v303 = vpop.xlane.xlu0 %302
        %vm304 = vcmp.eq.f32.partialorder %v301, %v303
        %v305 = vsel %vm304, %v300, inf
        %306 = vmin.xlane.f32.xlu0 %v305
        %v307 = vpop.xlane.xlu0 %306
        %v308 = vcvt.f32.s32 %v307
        %v309 = vcvt.f32.s32 %v303
        %v310 = vshll.u32 %v309, 16
        %v311 = vadd.s32 %v310, %v308
        %vm312 = vcmp.eq.s32.totalorder %v270, 0
        %v313 = vsel %vm312, %v296, 0
        %v314 = vsel %vm312, %v311, 0
        %vm315 = vcmp.eq.s32.totalorder %v270, %v296
        %vm316 = vcmp.eq.s32.totalorder %v270, %v311
        %v317 = vsel %vm315, -inf, %v267
        %v318 = vsel %vm316, -inf, %v268
        %v319 = vsel %vm271, %v317, -inf
        %320 = vmax.xlane.f32.xlu0 %v319
        %v321 = vpop.xlane.xlu0 %320
        %v322 = vsel %vm271, %v318, -inf
        %323 = vmax.xlane.f32.xlu0 %v322
        %v324 = vpop.xlane.xlu0 %323
        %vm325 = vcmp.eq.f32.partialorder %v317, %v321
        %vm326 = vcmp.eq.f32.partialorder %v318, %v324
        %v327 = vsel %vm325, %v270, 16
        %v328 = vsel %vm326, %v270, 16
        %v329 = vsel %vm271, %v327, 2147483647
        %v330 = vand.u32 %v329, 65535
        %v331 = vshra.s32 %v329, 16
        %v332 = vcvt.s32.f32 %v330
        %v333 = vcvt.s32.f32 %v331
        %334 = vmin.xlane.f32.xlu0 %v333
        %v335 = vpop.xlane.xlu0 %334
        %vm336 = vcmp.eq.f32.partialorder %v333, %v335
        %v337 = vsel %vm336, %v332, inf
        %338 = vmin.xlane.f32.xlu0 %v337
        %v339 = vpop.xlane.xlu0 %338
        %v340 = vcvt.f32.s32 %v339
        %v341 = vcvt.f32.s32 %v335
        %v342 = vshll.u32 %v341, 16
        %v343 = vadd.s32 %v342, %v340
        %v344 = vsel %vm271, %v328, 2147483647
        %v345 = vand.u32 %v344, 65535
        %v346 = vshra.s32 %v344, 16
        %v347 = vcvt.s32.f32 %v345
        %v348 = vcvt.s32.f32 %v346
        %349 = vmin.xlane.f32.xlu0 %v348
        %v350 = vpop.xlane.xlu0 %349
        %vm351 = vcmp.eq.f32.partialorder %v348, %v350
        %v352 = vsel %vm351, %v347, inf
        %353 = vmin.xlane.f32.xlu0 %v352
        %v354 = vpop.xlane.xlu0 %353
        %v355 = vcvt.f32.s32 %v354
        %v356 = vcvt.f32.s32 %v350
        %v357 = vshll.u32 %v356, 16
        %v358 = vadd.s32 %v357, %v355
        %vm359 = vcmp.eq.s32.totalorder %v270, 1
        %v360 = vsel %vm359, %v343, %v313
        %v361 = vsel %vm359, %v358, %v314
        %vm362 = vcmp.eq.s32.totalorder %v270, %v343
        %vm363 = vcmp.eq.s32.totalorder %v270, %v358
        %v364 = vsel %vm362, -inf, %v317
        %v365 = vsel %vm363, -inf, %v318
        %v366 = vsel %vm271, %v364, -inf
        %367 = vmax.xlane.f32.xlu0 %v366
        %v368 = vpop.xlane.xlu0 %367
        %v369 = vsel %vm271, %v365, -inf
        %370 = vmax.xlane.f32.xlu0 %v369
        %v371 = vpop.xlane.xlu0 %370
        %vm372 = vcmp.eq.f32.partialorder %v364, %v368
        %vm373 = vcmp.eq.f32.partialorder %v365, %v371
        %v374 = vsel %vm372, %v270, 16
        %v375 = vsel %vm373, %v270, 16
        %v376 = vsel %vm271, %v374, 2147483647
        %v377 = vand.u32 %v376, 65535
        %v378 = vshra.s32 %v376, 16
        %v379 = vcvt.s32.f32 %v377
        %v380 = vcvt.s32.f32 %v378
        %381 = vmin.xlane.f32.xlu0 %v380
        %v382 = vpop.xlane.xlu0 %381
        %vm383 = vcmp.eq.f32.partialorder %v380, %v382
        %v384 = vsel %vm383, %v379, inf
        %385 = vmin.xlane.f32.xlu0 %v384
        %v386 = vpop.xlane.xlu0 %385
        %v387 = vcvt.f32.s32 %v386
        %v388 = vcvt.f32.s32 %v382
        %v389 = vshll.u32 %v388, 16
        %v390 = vadd.s32 %v389, %v387
        %v391 = vsel %vm271, %v375, 2147483647
        %v392 = vand.u32 %v391, 65535
        %v393 = vshra.s32 %v391, 16
        %v394 = vcvt.s32.f32 %v392
        %v395 = vcvt.s32.f32 %v393
        %396 = vmin.xlane.f32.xlu0 %v395
        %v397 = vpop.xlane.xlu0 %396
        %vm398 = vcmp.eq.f32.partialorder %v395, %v397
        %v399 = vsel %vm398, %v394, inf
        %400 = vmin.xlane.f32.xlu0 %v399
        %v401 = vpop.xlane.xlu0 %400
        %v402 = vcvt.f32.s32 %v401
        %v403 = vcvt.f32.s32 %v397
        %v404 = vshll.u32 %v403, 16
        %v405 = vadd.s32 %v404, %v402
        %vm406 = vcmp.eq.s32.totalorder %v270, 2
        %v407 = vsel %vm406, %v390, %v360
        %v408 = vsel %vm406, %v405, %v361
        %vm409 = vcmp.eq.s32.totalorder %v270, %v390
        %vm410 = vcmp.eq.s32.totalorder %v270, %v405
        %v411 = vsel %vm409, -inf, %v364
        %v412 = vsel %vm410, -inf, %v365
        %v413 = vsel %vm271, %v411, -inf
        %414 = vmax.xlane.f32.xlu0 %v413
        %v415 = vpop.xlane.xlu0 %414
        %v416 = vsel %vm271, %v412, -inf
        %417 = vmax.xlane.f32.xlu0 %v416
        %v418 = vpop.xlane.xlu0 %417
        %vm419 = vcmp.eq.f32.partialorder %v411, %v415
        %vm420 = vcmp.eq.f32.partialorder %v412, %v418
        %v421 = vsel %vm419, %v270, 16
        %v422 = vsel %vm420, %v270, 16
        %v423 = vsel %vm271, %v421, 2147483647
        %v424 = vand.u32 %v423, 65535
        %v425 = vshra.s32 %v423, 16
        %v426 = vcvt.s32.f32 %v424
        %v427 = vcvt.s32.f32 %v425
        %428 = vmin.xlane.f32.xlu0 %v427
        %v429 = vpop.xlane.xlu0 %428
        %vm430 = vcmp.eq.f32.partialorder %v427, %v429
        %v431 = vsel %vm430, %v426, inf
        %432 = vmin.xlane.f32.xlu0 %v431
        %v433 = vpop.xlane.xlu0 %432
        %v434 = vcvt.f32.s32 %v433
        %v435 = vcvt.f32.s32 %v429
        %v436 = vshll.u32 %v435, 16
        %v437 = vadd.s32 %v436, %v434
        %v438 = vsel %vm271, %v422, 2147483647
        %v439 = vand.u32 %v438, 65535
        %v440 = vshra.s32 %v438, 16
        %v441 = vcvt.s32.f32 %v439
        %v442 = vcvt.s32.f32 %v440
        %443 = vmin.xlane.f32.xlu0 %v442
        %v444 = vpop.xlane.xlu0 %443
        %vm445 = vcmp.eq.f32.partialorder %v442, %v444
        %v446 = vsel %vm445, %v441, inf
        %447 = vmin.xlane.f32.xlu0 %v446
        %v448 = vpop.xlane.xlu0 %447
        %v449 = vcvt.f32.s32 %v448
        %v450 = vcvt.f32.s32 %v444
        %v451 = vshll.u32 %v450, 16
        %v452 = vadd.s32 %v451, %v449
        %vm453 = vcmp.eq.s32.totalorder %v270, 3
        %v454 = vsel %vm453, %v437, %v407
        %v455 = vsel %vm453, %v452, %v408
        %vm456 = vcmask 31744
        %457 = vst.msk [vmem:[%s134] sm:$0xff] %vm456, %v454
        %458 = vst.msk [vmem:[%s134 + $0x8] sm:$0xff] %vm456, %v455
        %s459 = sand.u32 %s52, 1
        %s460 = scalar_lea.sflag [#allocation4], %s459
        %s461 = sand.u32 %s52, 1
        %s462 = smul.addr %s461, 16
        %s463 = scalar_lea.vmem [#allocation5], %s462
        // Predicated region
        $region29: #{tpu_custom_call.1} parent=23 // pred_check
          %p464 = pneg %p62
        $region30: #{tpu_custom_call.1} parent=23 // pred_check_branch
          %466 = sbr.rel (%p464) target = $region32
        $region31: #{tpu_custom_call.1} parent=23 // pred_region
          %s468 = ssub.s32 256, 256
          %469 = vsyncadd %s460, %s468
          %s470 = smul.addr %s18, 2
          %s471 = smul.addr %s470, 128
          %s472 = scalar_lea.hbm %s1, %s471
          %s473 = sshll.u32 %s463, 4
          %s474 = int_to_ptr.vmem [resolvable:$true] %s473
          %479 = dma.vmem_to_hbm [thread:$0]  %s474, 256, %s472, %s460, 128, 128, 8
        $region32: #{tpu_custom_call.1} parent=23 // pred_fallthru
          _
      $region24: #{tpu_custom_call.1} parent=5 // pred_fallthru
        _
      %p480 = scmp.le.s32.totalorder 2, %s13
      // Predicated region
      $region33: #{tpu_custom_call.1} parent=5 // pred_check
        %p481 = pneg %p480
      $region34: #{tpu_custom_call.1} parent=5 // pred_check_branch
        %483 = sbr.rel (%p481) target = $region36
      $region35: #{tpu_custom_call.1} parent=5 // pred_region
        %s484 = ssub.s32 %s13, 2
        // Predicated region
        $region37: #{tpu_custom_call.1} parent=35 // pred_check
          %p485 = pneg %p68
        $region38: #{tpu_custom_call.1} parent=35 // pred_check_branch
          %487 = sbr.rel (%p485) target = $region40
        $region39: #{tpu_custom_call.1} parent=35 // pred_region
          %s488 = sand.u32 %s53, 1
          %s489 = scalar_lea.sflag [#allocation4], %s488
          %s490 = sand.u32 %s53, 1
          %s491 = smul.addr %s490, 16
          %s492 = scalar_lea.vmem [#allocation5], %s491
          %493 = dma.done %s489, 256
        $region40: #{tpu_custom_call.1} parent=35 // pred_fallthru
          _
      $region36: #{tpu_custom_call.1} parent=5 // pred_fallthru
        _
    $region6: #{tpu_custom_call.1} parent=1 // loop_footer
      %s17 = sadd.s32 1, %s13
    $region7: #{tpu_custom_call.1} parent=1 // loop_footer_branch
      %12 = sbr.rel target = $region3
    $region8: #{tpu_custom_call.1} parent=1 // loop_exit
      _
    %494 = vsyncpa [#allocation3], 1
    %s495 = scalar_lea.sflag [#allocation3], 1
    %496 = vsyncpa %s495, 1
    %497 = vsyncpa [#allocation4], 1
    %s498 = scalar_lea.sflag [#allocation4], 1
    %499 = vsyncpa %s498, 1

</llo_original>
